<compile_context>
chip_gen: v5e
topology: v5e:2x2
jax: 0.10.0
libtpu: 0.0.40
codegen_flags: <defaults>
</compile_context>

<pallas_src>
import jax
import jax.numpy as jnp
from jax.experimental import pallas as pl
from jax.experimental.pallas import tpu as pltpu

IN_F = 28 * 28        # 784 — kept unpadded (block last dim == full array dim is legal)
HID = 100
HID_PAD = 128         # hidden padded to one full lane group
OUT_F = 10
OUT_F_PAD = 128       # keep output lane width at 128 (unmasked stores)


def _round_up(n, m):
    return (n + m - 1) // m * m


def mlp_kernel(x_ref, w1_ref, b1_ref, w2_ref, b2_ref, w3_ref, b3_ref, o_ref):
    # x arrives as f32 via BlockSpec DMA (no wrapper copy); cast to bf16 on the VPU.
    x = x_ref[...].astype(jnp.bfloat16)

    # fc1 + ReLU (bf16 MXU operands, f32 accumulation, f32 bias/activation).
    h1 = jnp.dot(x, w1_ref[...], preferred_element_type=jnp.float32)
    h1 = jnp.maximum(h1 + b1_ref[...], 0.0)
    # dropout (eval mode) == identity

    # fc2 + ReLU
    h2 = jnp.dot(h1.astype(jnp.bfloat16), w2_ref[...],
                 preferred_element_type=jnp.float32)
    h2 = jnp.maximum(h2 + b2_ref[...], 0.0)
    # dropout (eval mode) == identity

    # fc3 (no activation); store narrow (bf16) to halve output writeback.
    out = jnp.dot(h2.astype(jnp.bfloat16), w3_ref[...],
                  preferred_element_type=jnp.float32)
    o_ref[...] = (out + b3_ref[...]).astype(o_ref.dtype)


def prepare_params(params):
    """One-time pad + cast of weights/biases (hoisted out of the per-call path).

    Weights stored (in_features, out_features). Only the hidden/output lane
    dims are padded 100->128 / 10->128 (zero-filled, so real outputs are
    unchanged). The fc1 contraction dim stays at 784."""
    def pad2(a, r, c, dtype):
        out = jnp.zeros((r, c), dtype)
        return out.at[:a.shape[0], :a.shape[1]].set(a.astype(dtype))

    return {
        "w1": pad2(params["w1"], IN_F, HID_PAD, jnp.bfloat16),
        "w2": pad2(params["w2"], HID_PAD, HID_PAD, jnp.bfloat16),
        "w3": pad2(params["w3"], HID_PAD, OUT_F_PAD, jnp.bfloat16),
        "b1": pad2(params["b1"], 1, HID_PAD, jnp.float32),
        "b2": pad2(params["b2"], 1, HID_PAD, jnp.float32),
        "b3": pad2(params["b3"], 1, OUT_F_PAD, jnp.float32),
    }


def _choose_batch_tile(n, block_batch):
    """Batch tile: large (amortize per-step overhead), multiple of 8 (sublane),
    and small enough that moderate N still gets >=2 grid steps (v7x dual-TC)."""
    if n <= 8:
        return n                         # single exact block (block dim == array dim)
    tb = min(block_batch, _round_up(pl.cdiv(n, 2), 8))
    return max(tb, 8)


def mlp_forward(x, padded_params, *, block_batch=1024):
    """x: (N, 784) float32, unpadded (DMA'd directly). Returns (N, 10) bfloat16."""
    n = x.shape[0]
    tb = _choose_batch_tile(n, block_batch)
    grid = (pl.cdiv(n, tb),)

    p = padded_params
    resident = lambda shape: pl.BlockSpec(shape, lambda i: (0, 0))

    flops = 2 * n * (IN_F * HID_PAD + HID_PAD * HID_PAD + HID_PAD * OUT_F_PAD)
    bytes_accessed = (n * IN_F * 4
                      + (p["w1"].size + p["w2"].size + p["w3"].size) * 2
                      + (p["b1"].size + p["b2"].size + p["b3"].size) * 4
                      + n * OUT_F_PAD * 2)

    out_padded = pl.pallas_call(
        mlp_kernel,
        out_shape=jax.ShapeDtypeStruct((n, OUT_F_PAD), jnp.bfloat16),
        grid=grid,
        in_specs=[
            pl.BlockSpec((tb, IN_F), lambda i: (i, 0)),   # x tile (f32, unpadded K)
            resident((IN_F, HID_PAD)),                    # w1 (bf16, VMEM-resident)
            resident((1, HID_PAD)),                       # b1
            resident((HID_PAD, HID_PAD)),                 # w2
            resident((1, HID_PAD)),                       # b2
            resident((HID_PAD, OUT_F_PAD)),               # w3
            resident((1, OUT_F_PAD)),                     # b3
        ],
        out_specs=pl.BlockSpec((tb, OUT_F_PAD), lambda i: (i, 0)),
        compiler_params=pltpu.CompilerParams(
            dimension_semantics=("parallel",),
            vmem_limit_bytes=48 * 1024 * 1024),
        cost_estimate=pl.CostEstimate(
            flops=flops, transcendentals=0, bytes_accessed=bytes_accessed),
    )(x, p["w1"], p["b1"], p["w2"], p["b2"], p["w3"], p["b3"])

    return out_padded[:, :OUT_F]


def init_params(key):
    """Deterministic init mirroring nn.Linear shapes (stored transposed:
    (in_features, out_features)). Biases kept 2D (1, F) for TPU layout."""
    h1, h2, out, inp = HID, HID, OUT_F, IN_F
    k = jax.random.split(key, 6)

    def uniform(kk, shape, fan_in):
        bound = 1.0 / jnp.sqrt(fan_in)
        return jax.random.uniform(kk, shape, jnp.float32, -bound, bound)

    return {
        "w1": uniform(k[0], (inp, h1), inp),
        "b1": uniform(k[1], (1, h1), inp),
        "w2": uniform(k[2], (h1, h2), h1),
        "b2": uniform(k[3], (1, h2), h1),
        "w3": uniform(k[4], (h2, out), h2),
        "b3": uniform(k[5], (1, out), h2),
    }


if __name__ == "__main__":
    key = jax.random.PRNGKey(0)
    k_x, k_p = jax.random.split(key)

    # Small NCHW input, same spatial size the module implies (28x28).
    batch = 2
    x_nchw = jax.random.normal(k_x, (batch, 1, 28, 28), dtype=jnp.float32)
    x_flat = x_nchw.reshape(-1, 28 * 28)          # == x.view(-1, 784)

    params = init_params(k_p)
    padded = prepare_params(params)               # one-time pad/cast, not per call

    out = mlp_forward(x_flat, padded)
    out = jax.block_until_ready(out)

    # Reference with the same precision policy (bf16 operands, f32 accumulation,
    # f32 bias/ReLU), eval-mode dropout == identity.
    xb = x_flat.astype(jnp.bfloat16)
    ref = jnp.maximum(
        jnp.dot(xb, params["w1"].astype(jnp.bfloat16),
                preferred_element_type=jnp.float32) + params["b1"], 0.0)
    ref = jnp.maximum(
        jnp.dot(ref.astype(jnp.bfloat16), params["w2"].astype(jnp.bfloat16),
                preferred_element_type=jnp.float32) + params["b2"], 0.0)
    ref = jnp.dot(ref.astype(jnp.bfloat16), params["w3"].astype(jnp.bfloat16),
                  preferred_element_type=jnp.float32) + params["b3"]

    assert out.shape == (batch, 10)
    assert jnp.allclose(out.astype(jnp.float32), ref, atol=2e-2, rtol=2e-2)

    print("KERNEL_OK")
</pallas_src>

<mosaic_0001>
module attributes {stable_mosaic.version = 11 : i64} {
  func.func @mlp_kernel(%arg0: i32, %arg1: memref<2x784xf32, #tpu.memory_space<vmem>>, %arg2: memref<784x128xbf16, #tpu.memory_space<vmem>>, %arg3: memref<1x128xf32, #tpu.memory_space<vmem>>, %arg4: memref<128x128xbf16, #tpu.memory_space<vmem>>, %arg5: memref<1x128xf32, #tpu.memory_space<vmem>>, %arg6: memref<128x128xbf16, #tpu.memory_space<vmem>>, %arg7: memref<1x128xf32, #tpu.memory_space<vmem>>, %arg8: memref<2x128xbf16, #tpu.memory_space<vmem>>) attributes {dimension_semantics = [#tpu.dimension_semantics<parallel>], iteration_bounds = array<i64: 1>, scalar_prefetch = 0 : i64, scratch_operands = 0 : i64, tpu.core_type = #tpu.core_type<tc>, window_params = [{transform_indices = @transform_0, window_bounds = array<i64: 2, 784>}, {pipeline_mode = #tpu.pipeline_mode<synchronous>, transform_indices = @transform_1, window_bounds = array<i64: 784, 128>}, {pipeline_mode = #tpu.pipeline_mode<synchronous>, transform_indices = @transform_2, window_bounds = array<i64: 1, 128>}, {pipeline_mode = #tpu.pipeline_mode<synchronous>, transform_indices = @transform_3, window_bounds = array<i64: 128, 128>}, {pipeline_mode = #tpu.pipeline_mode<synchronous>, transform_indices = @transform_4, window_bounds = array<i64: 1, 128>}, {pipeline_mode = #tpu.pipeline_mode<synchronous>, transform_indices = @transform_5, window_bounds = array<i64: 128, 128>}, {pipeline_mode = #tpu.pipeline_mode<synchronous>, transform_indices = @transform_6, window_bounds = array<i64: 1, 128>}, {transform_indices = @transform_7, window_bounds = array<i64: 2, 128>}]} {
    %c0 = arith.constant 0 : index
    %c0_0 = arith.constant 0 : index
    %0 = vector.load %arg1[%c0, %c0_0] : memref<2x784xf32, #tpu.memory_space<vmem>>, vector<2x784xf32>
    %1 = arith.truncf %0 : vector<2x784xf32> to vector<2x784xbf16>
    %c0_1 = arith.constant 0 : index
    %c0_2 = arith.constant 0 : index
    %2 = vector.load %arg2[%c0_1, %c0_2] : memref<784x128xbf16, #tpu.memory_space<vmem>>, vector<784x128xbf16>
    %cst = arith.constant dense<0.000000e+00> : vector<2x128xf32>
    %3 = tpu.matmul %1, %2, %cst {dimension_numbers = #tpu.dot_dimension_numbers<[1], [0], [0], [1], [0, 0, 1, 1], [], []>} : vector<2x784xbf16>, vector<784x128xbf16>, vector<2x128xf32> -> vector<2x128xf32>
    %c0_3 = arith.constant 0 : index
    %c0_4 = arith.constant 0 : index
    %4 = vector.load %arg3[%c0_3, %c0_4] : memref<1x128xf32, #tpu.memory_space<vmem>>, vector<1x128xf32>
    %5 = vector.broadcast %4 : vector<1x128xf32> to vector<2x128xf32>
    %6 = arith.addf %3, %5 : vector<2x128xf32>
    %cst_5 = arith.constant 0.000000e+00 : f32
    %7 = vector.broadcast %cst_5 : f32 to vector<2x128xf32>
    %8 = arith.maximumf %6, %7 : vector<2x128xf32>
    %9 = arith.truncf %8 : vector<2x128xf32> to vector<2x128xbf16>
    %c0_6 = arith.constant 0 : index
    %c0_7 = arith.constant 0 : index
    %10 = vector.load %arg4[%c0_6, %c0_7] : memref<128x128xbf16, #tpu.memory_space<vmem>>, vector<128x128xbf16>
    %cst_8 = arith.constant dense<0.000000e+00> : vector<2x128xf32>
    %11 = tpu.matmul %9, %10, %cst_8 {dimension_numbers = #tpu.dot_dimension_numbers<[1], [0], [0], [1], [0, 0, 1, 1], [], []>} : vector<2x128xbf16>, vector<128x128xbf16>, vector<2x128xf32> -> vector<2x128xf32>
    %c0_9 = arith.constant 0 : index
    %c0_10 = arith.constant 0 : index
    %12 = vector.load %arg5[%c0_9, %c0_10] : memref<1x128xf32, #tpu.memory_space<vmem>>, vector<1x128xf32>
    %13 = vector.broadcast %12 : vector<1x128xf32> to vector<2x128xf32>
    %14 = arith.addf %11, %13 : vector<2x128xf32>
    %cst_11 = arith.constant 0.000000e+00 : f32
    %15 = vector.broadcast %cst_11 : f32 to vector<2x128xf32>
    %16 = arith.maximumf %14, %15 : vector<2x128xf32>
    %17 = arith.truncf %16 : vector<2x128xf32> to vector<2x128xbf16>
    %c0_12 = arith.constant 0 : index
    %c0_13 = arith.constant 0 : index
    %18 = vector.load %arg6[%c0_12, %c0_13] : memref<128x128xbf16, #tpu.memory_space<vmem>>, vector<128x128xbf16>
    %cst_14 = arith.constant dense<0.000000e+00> : vector<2x128xf32>
    %19 = tpu.matmul %17, %18, %cst_14 {dimension_numbers = #tpu.dot_dimension_numbers<[1], [0], [0], [1], [0, 0, 1, 1], [], []>} : vector<2x128xbf16>, vector<128x128xbf16>, vector<2x128xf32> -> vector<2x128xf32>
    %c0_15 = arith.constant 0 : index
    %c0_16 = arith.constant 0 : index
    %20 = vector.load %arg7[%c0_15, %c0_16] : memref<1x128xf32, #tpu.memory_space<vmem>>, vector<1x128xf32>
    %21 = vector.broadcast %20 : vector<1x128xf32> to vector<2x128xf32>
    %22 = arith.addf %19, %21 : vector<2x128xf32>
    %23 = arith.truncf %22 : vector<2x128xf32> to vector<2x128xbf16>
    %c0_17 = arith.constant 0 : index
    %c0_18 = arith.constant 0 : index
    %24 = vector.load %arg8[%c0_17, %c0_18] : memref<2x128xbf16, #tpu.memory_space<vmem>>, vector<2x128xbf16>
    tpu.vector_store %arg8[%c0_17, %c0_18], %23 {strides = array<i32>} : memref<2x128xbf16, #tpu.memory_space<vmem>>, vector<2x128xbf16>,
    return
  }
  func.func @transform_0(%arg0: i32) -> (i32, i32) {
    %c0_i32 = arith.constant 0 : i32
    %c0_i32_0 = arith.constant 0 : i32
    return %arg0, %c0_i32 : i32, i32
  }
  func.func @transform_1(%arg0: i32) -> (i32, i32) {
    %c0_i32 = arith.constant 0 : i32
    %c0_i32_0 = arith.constant 0 : i32
    %c0_i32_1 = arith.constant 0 : i32
    return %c0_i32, %c0_i32_0 : i32, i32
  }
  func.func @transform_2(%arg0: i32) -> (i32, i32) {
    %c0_i32 = arith.constant 0 : i32
    %c0_i32_0 = arith.constant 0 : i32
    %c0_i32_1 = arith.constant 0 : i32
    return %c0_i32, %c0_i32_0 : i32, i32
  }
  func.func @transform_3(%arg0: i32) -> (i32, i32) {
    %c0_i32 = arith.constant 0 : i32
    %c0_i32_0 = arith.constant 0 : i32
    %c0_i32_1 = arith.constant 0 : i32
    return %c0_i32, %c0_i32_0 : i32, i32
  }
  func.func @transform_4(%arg0: i32) -> (i32, i32) {
    %c0_i32 = arith.constant 0 : i32
    %c0_i32_0 = arith.constant 0 : i32
    %c0_i32_1 = arith.constant 0 : i32
    return %c0_i32, %c0_i32_0 : i32, i32
  }
  func.func @transform_5(%arg0: i32) -> (i32, i32) {
    %c0_i32 = arith.constant 0 : i32
    %c0_i32_0 = arith.constant 0 : i32
    %c0_i32_1 = arith.constant 0 : i32
    return %c0_i32, %c0_i32_0 : i32, i32
  }
  func.func @transform_6(%arg0: i32) -> (i32, i32) {
    %c0_i32 = arith.constant 0 : i32
    %c0_i32_0 = arith.constant 0 : i32
    %c0_i32_1 = arith.constant 0 : i32
    return %c0_i32, %c0_i32_0 : i32, i32
  }
  func.func @transform_7(%arg0: i32) -> (i32, i32) {
    %c0_i32 = arith.constant 0 : i32
    %c0_i32_0 = arith.constant 0 : i32
    return %arg0, %c0_i32 : i32, i32
  }
}

</mosaic_0001>

<llo_original>
// kernel: tpu_custom_call.1
$region0: #{tpu_custom_call.1}
  #allocation0 [shape = 'u32[]', space=smem, size = 0x4, offset = 0x4, fixed_abs, tag = 'smem constant byte address 0x4 - core index']
  #allocation1 [shape = 'u32[72,128]{1,0:T(1,128)}', space=vmem, size = 0x9000, scoped, tag = 'internal scratch']
  %s0 = inlined_call_operand.hbm [shape: f32[2,784], index: 0, kind: input, shape index: {}]
  %s1 = inlined_call_operand.hbm [shape: bf16[784,128], index: 1, kind: input, shape index: {}]
  %s2 = inlined_call_operand.vmem [shape: f32[1,128], index: 2, kind: input, shape index: {}]
  %s3 = inlined_call_operand.hbm [shape: bf16[128,128], index: 3, kind: input, shape index: {}]
  %s4 = inlined_call_operand.vmem [shape: f32[1,128], index: 4, kind: input, shape index: {}]
  %s5 = inlined_call_operand.hbm [shape: bf16[128,128], index: 5, kind: input, shape index: {}]
  %s6 = inlined_call_operand.vmem [shape: f32[1,128], index: 6, kind: input, shape index: {}]
  %s7 = inlined_call_operand.hbm [shape: bf16[2,128], index: 7, kind: output, shape index: {}]
  %s8 = sld [smem:[#allocation0]]
  $region54: #{tpu_custom_call.1} parent=0
    _
  %s10 = ssub.s32 1, %s8
  %s11 = scalar_select 0, %s10, %s8
  $region1: #{tpu_custom_call.1} parent=0
    #allocation2 [shape = 'u8[7168]{0}', space=vmem, size = 0x1c00, scoped, tag = 'input window, operand 0, single buffered']
    #allocation3 [shape = 's32[1]{0}', space=sflag, size = 0x4, scoped, tag = 'scoped memory for tpu_custom_call.1']
    #allocation4 [shape = 's32[1]{0}', space=sflag, size = 0x4, scoped, tag = 'scoped memory for tpu_custom_call.1']
    #allocation5 [shape = 'u8[200704]{0}', space=vmem, size = 0x31000, scoped, tag = 'input window, operand 1, single buffered']
    #allocation6 [shape = 's32[1]{0}', space=sflag, size = 0x4, scoped, tag = 'scoped memory for tpu_custom_call.1']
    #allocation7 [shape = 'u8[32768]{0}', space=vmem, size = 0x8000, scoped, tag = 'input window, operand 3, single buffered']
    #allocation8 [shape = 'u8[32768]{0}', space=vmem, size = 0x8000, scoped, tag = 'input window, operand 5, single buffered']
    #allocation9 [shape = 's32[1]{0}', space=sflag, size = 0x4, scoped, tag = 'scoped memory for tpu_custom_call.1']
    #allocation10 [shape = 'u8[512]{0}', space=vmem, size = 0x400, scoped, tag = 'output window, operand 0, single buffered']
    %12 = vsyncpa [#allocation3], 0
    %13 = vsyncpa [#allocation6], 0
    %14 = vsyncpa [#allocation9], 0
    %15 = vsyncpa [#allocation4], 0
    // Predicated region
    $region2: #{tpu_custom_call.1} parent=1 // pred_check
      _
    $region3: #{tpu_custom_call.1} parent=1 // pred_check_branch
      %17 = sbr.rel (0) target = $region5
    $region4: #{tpu_custom_call.1} parent=1 // pred_region
      %19 = vsyncadd [#allocation3], 0
      %s21 = sshll.u32 %s0, 4
      %s22 = int_to_ptr.hbm [resolvable:$true] %s21
      %s23 = sshll.u32 [#allocation2], 4
      %s24 = int_to_ptr.vmem [resolvable:$true] %s23
      %26 = dma.hbm_to_vmem [thread:$0]  %s22, 224, %s24, [#allocation3]
    $region5: #{tpu_custom_call.1} parent=1 // pred_fallthru
      _
    // Predicated region
    $region6: #{tpu_custom_call.1} parent=1 // pred_check
      _
    $region7: #{tpu_custom_call.1} parent=1 // pred_check_branch
      %28 = sbr.rel (0) target = $region9
    $region8: #{tpu_custom_call.1} parent=1 // pred_region
      %30 = vsyncadd [#allocation6], 0
      %s31 = sshll.u32 %s1, 4
      %s32 = int_to_ptr.hbm [resolvable:$true] %s31
      %s33 = sshll.u32 [#allocation5], 4
      %s34 = int_to_ptr.vmem [resolvable:$true] %s33
      %39 = dma.hbm_to_vmem [thread:$0]  %s32, 6272, %s34, [#allocation6], 64, 64, 4
    $region9: #{tpu_custom_call.1} parent=1 // pred_fallthru
      _
    // Predicated region
    $region10: #{tpu_custom_call.1} parent=1 // pred_check
      _
    $region11: #{tpu_custom_call.1} parent=1 // pred_check_branch
      %41 = sbr.rel (0) target = $region13
    $region12: #{tpu_custom_call.1} parent=1 // pred_region
      _
    $region13: #{tpu_custom_call.1} parent=1 // pred_fallthru
      _
    // Predicated region
    $region14: #{tpu_custom_call.1} parent=1 // pred_check
      _
    $region15: #{tpu_custom_call.1} parent=1 // pred_check_branch
      %43 = sbr.rel (0) target = $region17
    $region16: #{tpu_custom_call.1} parent=1 // pred_region
      %45 = vsyncadd [#allocation6], 0
      %s46 = sshll.u32 %s3, 4
      %s47 = int_to_ptr.hbm [resolvable:$true] %s46
      %s48 = sshll.u32 [#allocation7], 4
      %s49 = int_to_ptr.vmem [resolvable:$true] %s48
      %54 = dma.hbm_to_vmem [thread:$0]  %s47, 1024, %s49, [#allocation6], 64, 64, 4
    $region17: #{tpu_custom_call.1} parent=1 // pred_fallthru
      _
    // Predicated region
    $region18: #{tpu_custom_call.1} parent=1 // pred_check
      _
    $region19: #{tpu_custom_call.1} parent=1 // pred_check_branch
      %56 = sbr.rel (0) target = $region21
    $region20: #{tpu_custom_call.1} parent=1 // pred_region
      _
    $region21: #{tpu_custom_call.1} parent=1 // pred_fallthru
      _
    // Predicated region
    $region22: #{tpu_custom_call.1} parent=1 // pred_check
      _
    $region23: #{tpu_custom_call.1} parent=1 // pred_check_branch
      %58 = sbr.rel (0) target = $region25
    $region24: #{tpu_custom_call.1} parent=1 // pred_region
      %60 = vsyncadd [#allocation9], 0
      %s61 = sshll.u32 %s5, 4
      %s62 = int_to_ptr.hbm [resolvable:$true] %s61
      %s63 = sshll.u32 [#allocation8], 4
      %s64 = int_to_ptr.vmem [resolvable:$true] %s63
      %69 = dma.hbm_to_vmem [thread:$0]  %s62, 1024, %s64, [#allocation9], 64, 64, 4
    $region25: #{tpu_custom_call.1} parent=1 // pred_fallthru
      _
    // Predicated region
    $region26: #{tpu_custom_call.1} parent=1 // pred_check
      _
    $region27: #{tpu_custom_call.1} parent=1 // pred_check_branch
      %71 = sbr.rel (0) target = $region29
    $region28: #{tpu_custom_call.1} parent=1 // pred_region
      _
    $region29: #{tpu_custom_call.1} parent=1 // pred_fallthru
      _
    // Predicated region
    $region30: #{tpu_custom_call.1} parent=1 // pred_check
      _
    $region31: #{tpu_custom_call.1} parent=1 // pred_check_branch
      %73 = sbr.rel (0) target = $region33
    $region32: #{tpu_custom_call.1} parent=1 // pred_region
      %75 = dma.done [#allocation3], 224
    $region33: #{tpu_custom_call.1} parent=1 // pred_fallthru
      _
    // Predicated region
    $region34: #{tpu_custom_call.1} parent=1 // pred_check
      _
    $region35: #{tpu_custom_call.1} parent=1 // pred_check_branch
      %77 = sbr.rel (0) target = $region37
    $region36: #{tpu_custom_call.1} parent=1 // pred_region
      %79 = dma.done [#allocation6], 6272
    $region37: #{tpu_custom_call.1} parent=1 // pred_fallthru
      _
    // Predicated region
    $region38: #{tpu_custom_call.1} parent=1 // pred_check
      _
    $region39: #{tpu_custom_call.1} parent=1 // pred_check_branch
      %81 = sbr.rel (0) target = $region41
    $region40: #{tpu_custom_call.1} parent=1 // pred_region
      %83 = dma.done [#allocation6], 1024
    $region41: #{tpu_custom_call.1} parent=1 // pred_fallthru
      _
    // Predicated region
    $region42: #{tpu_custom_call.1} parent=1 // pred_check
      _
    $region43: #{tpu_custom_call.1} parent=1 // pred_check_branch
      %85 = sbr.rel (0) target = $region45
    $region44: #{tpu_custom_call.1} parent=1 // pred_region
      %87 = dma.done [#allocation9], 1024
    $region45: #{tpu_custom_call.1} parent=1 // pred_fallthru
      _
    %v89 = vld [vmem:[#allocation2] sm:$0xff]
    %v90 = vld [vmem:[#allocation2 + $0x8] sm:$0x3f]
    %93 = vst [vmem:[#allocation1] ss:$4 sm:$0xff] %v89
    %s94 = scalar_lea.vmem [#allocation1], 32
    %95 = vst [vmem:[%s94] ss:$4 sm:$0xff] %v90
    %v96 = vld.sshfl [vmem:[#allocation1] sm:$0xff pattern:$0x73625140]
    %v97 = vld.sshfl [vmem:[#allocation1 + $0x8] sm:$0xff pattern:$0x73625140]
    %v98 = vld.sshfl [vmem:[#allocation1 + $0x10] sm:$0xff pattern:$0x73625140]
    %v99 = vld.sshfl [vmem:[#allocation1 + $0x18] sm:$0xff pattern:$0x73625140]
    %v100 = vld.sshfl [vmem:[#allocation1 + $0x20] sm:$0xff pattern:$0x73625140]
    %v101 = vld.sshfl [vmem:[#allocation1 + $0x28] sm:$0xff pattern:$0x73625140]
    %v102 = vld.sshfl [vmem:[#allocation1 + $0x30] sm:$0xff pattern:$0x73625140]
    %v110 = vpack.c.bf16 %v96, %v96
    %v111 = vpack.c.bf16 %v97, %v97
    %v112 = vpack.c.bf16 %v98, %v98
    %v113 = vpack.c.bf16 %v99, %v99
    %v114 = vpack.c.bf16 %v100, %v100
    %v115 = vpack.c.bf16 %v101, %v101
    %v116 = vpack.c.bf16 %v102, %v102
    %v117 = vld [vmem:[#allocation5] sm:$0xf]
    %v118 = vld [vmem:[#allocation5 + $0x4] sm:$0xf]
    %v119 = vld [vmem:[#allocation5 + $0x8] sm:$0xf]
    %v120 = vld [vmem:[#allocation5 + $0xc] sm:$0xf]
    %v121 = vld [vmem:[#allocation5 + $0x10] sm:$0xf]
    %v122 = vld [vmem:[#allocation5 + $0x14] sm:$0xf]
    %v123 = vld [vmem:[#allocation5 + $0x18] sm:$0xf]
    %v124 = vld [vmem:[#allocation5 + $0x1c] sm:$0xf]
    %v125 = vld [vmem:[#allocation5 + $0x20] sm:$0xf]
    %v126 = vld [vmem:[#allocation5 + $0x24] sm:$0xf]
    %v127 = vld [vmem:[#allocation5 + $0x28] sm:$0xf]
    %v128 = vld [vmem:[#allocation5 + $0x2c] sm:$0xf]
    %v129 = vld [vmem:[#allocation5 + $0x30] sm:$0xf]
    %v130 = vld [vmem:[#allocation5 + $0x34] sm:$0xf]
    %v131 = vld [vmem:[#allocation5 + $0x38] sm:$0xf]
    %v132 = vld [vmem:[#allocation5 + $0x3c] sm:$0xf]
    %v133 = vld [vmem:[#allocation5 + $0x40] sm:$0xf]
    %v134 = vld [vmem:[#allocation5 + $0x44] sm:$0xf]
    %v135 = vld [vmem:[#allocation5 + $0x48] sm:$0xf]
    %v136 = vld [vmem:[#allocation5 + $0x4c] sm:$0xf]
    %v137 = vld [vmem:[#allocation5 + $0x50] sm:$0xf]
    %v138 = vld [vmem:[#allocation5 + $0x54] sm:$0xf]
    %v139 = vld [vmem:[#allocation5 + $0x58] sm:$0xf]
    %v140 = vld [vmem:[#allocation5 + $0x5c] sm:$0xf]
    %v141 = vld [vmem:[#allocation5 + $0x60] sm:$0xf]
    %v142 = vld [vmem:[#allocation5 + $0x64] sm:$0xf]
    %v143 = vld [vmem:[#allocation5 + $0x68] sm:$0xf]
    %v144 = vld [vmem:[#allocation5 + $0x6c] sm:$0xf]
    %v145 = vld [vmem:[#allocation5 + $0x70] sm:$0xf]
    %v146 = vld [vmem:[#allocation5 + $0x74] sm:$0xf]
    %v147 = vld [vmem:[#allocation5 + $0x78] sm:$0xf]
    %v148 = vld [vmem:[#allocation5 + $0x7c] sm:$0xf]
    %v149 = vld [vmem:[#allocation5 + $0x80] sm:$0xf]
    %v150 = vld [vmem:[#allocation5 + $0x84] sm:$0xf]
    %v151 = vld [vmem:[#allocation5 + $0x88] sm:$0xf]
    %v152 = vld [vmem:[#allocation5 + $0x8c] sm:$0xf]
    %v153 = vld [vmem:[#allocation5 + $0x90] sm:$0xf]
    %v154 = vld [vmem:[#allocation5 + $0x94] sm:$0xf]
    %v155 = vld [vmem:[#allocation5 + $0x98] sm:$0xf]
    %v156 = vld [vmem:[#allocation5 + $0x9c] sm:$0xf]
    %v157 = vld [vmem:[#allocation5 + $0xa0] sm:$0xf]
    %v158 = vld [vmem:[#allocation5 + $0xa4] sm:$0xf]
    %v159 = vld [vmem:[#allocation5 + $0xa8] sm:$0xf]
    %v160 = vld [vmem:[#allocation5 + $0xac] sm:$0xf]
    %v161 = vld [vmem:[#allocation5 + $0xb0] sm:$0xf]
    %v162 = vld [vmem:[#allocation5 + $0xb4] sm:$0xf]
    %v163 = vld [vmem:[#allocation5 + $0xb8] sm:$0xf]
    %v164 = vld [vmem:[#allocation5 + $0xbc] sm:$0xf]
    %v165 = vld [vmem:[#allocation5 + $0xc0] sm:$0xf]
    %v166 = vld [vmem:[#allocation5 + $0xc4] sm:$0xf]
    %v167 = vld [vmem:[#allocation5 + $0xc8] sm:$0xf]
    %v168 = vld [vmem:[#allocation5 + $0xcc] sm:$0xf]
    %v169 = vld [vmem:[#allocation5 + $0xd0] sm:$0xf]
    %v170 = vld [vmem:[#allocation5 + $0xd4] sm:$0xf]
    %v171 = vld [vmem:[#allocation5 + $0xd8] sm:$0xf]
    %v172 = vld [vmem:[#allocation5 + $0xdc] sm:$0xf]
    %v173 = vld [vmem:[#allocation5 + $0xe0] sm:$0xf]
    %v174 = vld [vmem:[#allocation5 + $0xe4] sm:$0xf]
    %v175 = vld [vmem:[#allocation5 + $0xe8] sm:$0xf]
    %v176 = vld [vmem:[#allocation5 + $0xec] sm:$0xf]
    %v177 = vld [vmem:[#allocation5 + $0xf0] sm:$0xf]
    %v178 = vld [vmem:[#allocation5 + $0xf4] sm:$0xf]
    %v179 = vld [vmem:[#allocation5 + $0xf8] sm:$0xf]
    %v180 = vld [vmem:[#allocation5 + $0xfc] sm:$0xf]
    %v181 = vld [vmem:[#allocation5 + $0x100] sm:$0xf]
    %v182 = vld [vmem:[#allocation5 + $0x104] sm:$0xf]
    %v183 = vld [vmem:[#allocation5 + $0x108] sm:$0xf]
    %v184 = vld [vmem:[#allocation5 + $0x10c] sm:$0xf]
    %v185 = vld [vmem:[#allocation5 + $0x110] sm:$0xf]
    %v186 = vld [vmem:[#allocation5 + $0x114] sm:$0xf]
    %v187 = vld [vmem:[#allocation5 + $0x118] sm:$0xf]
    %v188 = vld [vmem:[#allocation5 + $0x11c] sm:$0xf]
    %v189 = vld [vmem:[#allocation5 + $0x120] sm:$0xf]
    %v190 = vld [vmem:[#allocation5 + $0x124] sm:$0xf]
    %v191 = vld [vmem:[#allocation5 + $0x128] sm:$0xf]
    %v192 = vld [vmem:[#allocation5 + $0x12c] sm:$0xf]
    %v193 = vld [vmem:[#allocation5 + $0x130] sm:$0xf]
    %v194 = vld [vmem:[#allocation5 + $0x134] sm:$0xf]
    %v195 = vld [vmem:[#allocation5 + $0x138] sm:$0xf]
    %v196 = vld [vmem:[#allocation5 + $0x13c] sm:$0xf]
    %v197 = vld [vmem:[#allocation5 + $0x140] sm:$0xf]
    %v198 = vld [vmem:[#allocation5 + $0x144] sm:$0xf]
    %v199 = vld [vmem:[#allocation5 + $0x148] sm:$0xf]
    %v200 = vld [vmem:[#allocation5 + $0x14c] sm:$0xf]
    %v201 = vld [vmem:[#allocation5 + $0x150] sm:$0xf]
    %v202 = vld [vmem:[#allocation5 + $0x154] sm:$0xf]
    %v203 = vld [vmem:[#allocation5 + $0x158] sm:$0xf]
    %v204 = vld [vmem:[#allocation5 + $0x15c] sm:$0xf]
    %v205 = vld [vmem:[#allocation5 + $0x160] sm:$0xf]
    %v206 = vld [vmem:[#allocation5 + $0x164] sm:$0xf]
    %v207 = vld [vmem:[#allocation5 + $0x168] sm:$0xf]
    %v208 = vld [vmem:[#allocation5 + $0x16c] sm:$0xf]
    %v209 = vld [vmem:[#allocation5 + $0x170] sm:$0xf]
    %v210 = vld [vmem:[#allocation5 + $0x174] sm:$0xf]
    %v211 = vld [vmem:[#allocation5 + $0x178] sm:$0xf]
    %v212 = vld [vmem:[#allocation5 + $0x17c] sm:$0xf]
    %v213 = vld [vmem:[#allocation5 + $0x180] sm:$0xf]
    %v214 = vld [vmem:[#allocation5 + $0x184] sm:$0xf]
    %v215 = vld [vmem:[%s2] sm:$0x1]
    %v217 = vperm.slane %v215, 0
    %v317 = vunpack.c.l.b16 %v117
    %v318 = vunpack.c.l.b16 %v118
    %v319 = vunpack.c.l.b16 %v119
    %v320 = vunpack.c.l.b16 %v120
    %v321 = vunpack.c.l.b16 %v121
    %v322 = vunpack.c.l.b16 %v122
    %v323 = vunpack.c.l.b16 %v123
    %v324 = vunpack.c.l.b16 %v124
    %v325 = vunpack.c.l.b16 %v125
    %v326 = vunpack.c.l.b16 %v126
    %v327 = vunpack.c.l.b16 %v127
    %v328 = vunpack.c.l.b16 %v128
    %v329 = vunpack.c.l.b16 %v129
    %v330 = vunpack.c.l.b16 %v130
    %v331 = vunpack.c.l.b16 %v131
    %v332 = vunpack.c.l.b16 %v132
    %v333 = vunpack.c.l.b16 %v133
    %v334 = vunpack.c.l.b16 %v134
    %v335 = vunpack.c.l.b16 %v135
    %v336 = vunpack.c.l.b16 %v136
    %v337 = vunpack.c.l.b16 %v137
    %v338 = vunpack.c.l.b16 %v138
    %v339 = vunpack.c.l.b16 %v139
    %v340 = vunpack.c.l.b16 %v140
    %v341 = vunpack.c.l.b16 %v141
    %v342 = vunpack.c.l.b16 %v142
    %v343 = vunpack.c.l.b16 %v143
    %v344 = vunpack.c.l.b16 %v144
    %v345 = vunpack.c.l.b16 %v145
    %v346 = vunpack.c.l.b16 %v146
    %v347 = vunpack.c.l.b16 %v147
    %v348 = vunpack.c.l.b16 %v148
    %v349 = vunpack.c.l.b16 %v149
    %v350 = vunpack.c.l.b16 %v150
    %v351 = vunpack.c.l.b16 %v151
    %v352 = vunpack.c.l.b16 %v152
    %v353 = vunpack.c.l.b16 %v153
    %v354 = vunpack.c.l.b16 %v154
    %v355 = vunpack.c.l.b16 %v155
    %v356 = vunpack.c.l.b16 %v156
    %v357 = vunpack.c.l.b16 %v157
    %v358 = vunpack.c.l.b16 %v158
    %v359 = vunpack.c.l.b16 %v159
    %v360 = vunpack.c.l.b16 %v160
    %v361 = vunpack.c.l.b16 %v161
    %v362 = vunpack.c.l.b16 %v162
    %v363 = vunpack.c.l.b16 %v163
    %v364 = vunpack.c.l.b16 %v164
    %v365 = vunpack.c.l.b16 %v165
    %v366 = vunpack.c.l.b16 %v166
    %v367 = vunpack.c.l.b16 %v167
    %v368 = vunpack.c.l.b16 %v168
    %v369 = vunpack.c.l.b16 %v169
    %v370 = vunpack.c.l.b16 %v170
    %v371 = vunpack.c.l.b16 %v171
    %v372 = vunpack.c.l.b16 %v172
    %v373 = vunpack.c.l.b16 %v173
    %v374 = vunpack.c.l.b16 %v174
    %v375 = vunpack.c.l.b16 %v175
    %v376 = vunpack.c.l.b16 %v176
    %v377 = vunpack.c.l.b16 %v177
    %v378 = vunpack.c.l.b16 %v178
    %v379 = vunpack.c.l.b16 %v179
    %v380 = vunpack.c.l.b16 %v180
    %v381 = vunpack.c.l.b16 %v181
    %v382 = vunpack.c.l.b16 %v182
    %v383 = vunpack.c.l.b16 %v183
    %v384 = vunpack.c.l.b16 %v184
    %v385 = vunpack.c.l.b16 %v185
    %v386 = vunpack.c.l.b16 %v186
    %v387 = vunpack.c.l.b16 %v187
    %v388 = vunpack.c.l.b16 %v188
    %v389 = vunpack.c.l.b16 %v189
    %v390 = vunpack.c.l.b16 %v190
    %v391 = vunpack.c.l.b16 %v191
    %v392 = vunpack.c.l.b16 %v192
    %v393 = vunpack.c.l.b16 %v193
    %v394 = vunpack.c.l.b16 %v194
    %v395 = vunpack.c.l.b16 %v195
    %v396 = vunpack.c.l.b16 %v196
    %v397 = vunpack.c.l.b16 %v197
    %v398 = vunpack.c.l.b16 %v198
    %v399 = vunpack.c.l.b16 %v199
    %v400 = vunpack.c.l.b16 %v200
    %v401 = vunpack.c.l.b16 %v201
    %v402 = vunpack.c.l.b16 %v202
    %v403 = vunpack.c.l.b16 %v203
    %v404 = vunpack.c.l.b16 %v204
    %v405 = vunpack.c.l.b16 %v205
    %v406 = vunpack.c.l.b16 %v206
    %v407 = vunpack.c.l.b16 %v207
    %v408 = vunpack.c.l.b16 %v208
    %v409 = vunpack.c.l.b16 %v209
    %v410 = vunpack.c.l.b16 %v210
    %v411 = vunpack.c.l.b16 %v211
    %v412 = vunpack.c.l.b16 %v212
    %v413 = vunpack.c.l.b16 %v213
    %v414 = vunpack.c.l.b16 %v214
    %v415 = vpack.c.b16 %v318, %v317
    %v416 = vpack.c.b16 %v320, %v319
    %v417 = vpack.c.b16 %v322, %v321
    %v418 = vpack.c.b16 %v324, %v323
    %v419 = vpack.c.b16 %v326, %v325
    %v420 = vpack.c.b16 %v328, %v327
    %v421 = vpack.c.b16 %v330, %v329
    %v422 = vpack.c.b16 %v332, %v331
    %v423 = vpack.c.b16 %v334, %v333
    %v424 = vpack.c.b16 %v336, %v335
    %v425 = vpack.c.b16 %v338, %v337
    %v426 = vpack.c.b16 %v340, %v339
    %v427 = vpack.c.b16 %v342, %v341
    %v428 = vpack.c.b16 %v344, %v343
    %v429 = vpack.c.b16 %v346, %v345
    %v430 = vpack.c.b16 %v348, %v347
    %v431 = vpack.c.b16 %v350, %v349
    %v432 = vpack.c.b16 %v352, %v351
    %v433 = vpack.c.b16 %v354, %v353
    %v434 = vpack.c.b16 %v356, %v355
    %v435 = vpack.c.b16 %v358, %v357
    %v436 = vpack.c.b16 %v360, %v359
    %v437 = vpack.c.b16 %v362, %v361
    %v438 = vpack.c.b16 %v364, %v363
    %v439 = vpack.c.b16 %v366, %v365
    %v440 = vpack.c.b16 %v368, %v367
    %v441 = vpack.c.b16 %v370, %v369
    %v442 = vpack.c.b16 %v372, %v371
    %v443 = vpack.c.b16 %v374, %v373
    %v444 = vpack.c.b16 %v376, %v375
    %v445 = vpack.c.b16 %v378, %v377
    %v446 = vpack.c.b16 %v380, %v379
    %v447 = vpack.c.b16 %v382, %v381
    %v448 = vpack.c.b16 %v384, %v383
    %v449 = vpack.c.b16 %v386, %v385
    %v450 = vpack.c.b16 %v388, %v387
    %v451 = vpack.c.b16 %v390, %v389
    %v452 = vpack.c.b16 %v392, %v391
    %v453 = vpack.c.b16 %v394, %v393
    %v454 = vpack.c.b16 %v396, %v395
    %v455 = vpack.c.b16 %v398, %v397
    %v456 = vpack.c.b16 %v400, %v399
    %v457 = vpack.c.b16 %v402, %v401
    %v458 = vpack.c.b16 %v404, %v403
    %v459 = vpack.c.b16 %v406, %v405
    %v460 = vpack.c.b16 %v408, %v407
    %v461 = vpack.c.b16 %v410, %v409
    %v462 = vpack.c.b16 %v412, %v411
    %v463 = vpack.c.b16 %v414, %v413
    %vm513 = vcmask 130048
    %v515 = vsel %vm513, %v116, 0
    %517 = vmatpush.bf16.msra.mxu0 %v422
    %518 = vmatpush.bf16.msra.mxu0 %v421
    %519 = vmatpush.bf16.msra.mxu0 %v420
    %520 = vmatpush.bf16.msra.mxu0 %v419
    %521 = vmatpush.bf16.msra.mxu0 %v418
    %522 = vmatpush.bf16.msra.mxu0 %v417
    %523 = vmatpush.bf16.msra.mxu0 %v416
    %524 = vmatpush.bf16.msra.mxu0 %v415
    %525 = vmatmul.bf16.gmra.mxu0 %v110
    %v526 = vpop.f32.mrf.mxu0
    %v527 = vadd.f32 %v217, %v526
    %v528 = vpop.f32.mrf.mxu0
    %529 = vdwg.mxu0
    %530 = vmatpush.bf16.msra.mxu0 %v430
    %531 = vmatpush.bf16.msra.mxu0 %v429
    %532 = vmatpush.bf16.msra.mxu0 %v428
    %533 = vmatpush.bf16.msra.mxu0 %v427
    %534 = vmatpush.bf16.msra.mxu0 %v426
    %535 = vmatpush.bf16.msra.mxu0 %v425
    %536 = vmatpush.bf16.msra.mxu0 %v424
    %537 = vmatpush.bf16.msra.mxu0 %v423
    %538 = vmatmul.bf16.gmra.mxu0 %v111
    %v539 = vpop.f32.mrf.mxu0
    %v540 = vadd.f32 %v527, %v539
    %v541 = vpop.f32.mrf.mxu0
    %542 = vdwg.mxu0
    %543 = vmatpush.bf16.msra.mxu0 %v438
    %544 = vmatpush.bf16.msra.mxu0 %v437
    %545 = vmatpush.bf16.msra.mxu0 %v436
    %546 = vmatpush.bf16.msra.mxu0 %v435
    %547 = vmatpush.bf16.msra.mxu0 %v434
    %548 = vmatpush.bf16.msra.mxu0 %v433
    %549 = vmatpush.bf16.msra.mxu0 %v432
    %550 = vmatpush.bf16.msra.mxu0 %v431
    %551 = vmatmul.bf16.gmra.mxu0 %v112
    %v552 = vpop.f32.mrf.mxu0
    %v553 = vadd.f32 %v540, %v552
    %v554 = vpop.f32.mrf.mxu0
    %555 = vdwg.mxu0
    %556 = vmatpush.bf16.msra.mxu0 %v446
    %557 = vmatpush.bf16.msra.mxu0 %v445
    %558 = vmatpush.bf16.msra.mxu0 %v444
    %559 = vmatpush.bf16.msra.mxu0 %v443
    %560 = vmatpush.bf16.msra.mxu0 %v442
    %561 = vmatpush.bf16.msra.mxu0 %v441
    %562 = vmatpush.bf16.msra.mxu0 %v440
    %563 = vmatpush.bf16.msra.mxu0 %v439
    %564 = vmatmul.bf16.gmra.mxu0 %v113
    %v565 = vpop.f32.mrf.mxu0
    %v566 = vadd.f32 %v553, %v565
    %v567 = vpop.f32.mrf.mxu0
    %568 = vdwg.mxu0
    %569 = vmatpush.bf16.msra.mxu0 %v454
    %570 = vmatpush.bf16.msra.mxu0 %v453
    %571 = vmatpush.bf16.msra.mxu0 %v452
    %572 = vmatpush.bf16.msra.mxu0 %v451
    %573 = vmatpush.bf16.msra.mxu0 %v450
    %574 = vmatpush.bf16.msra.mxu0 %v449
    %575 = vmatpush.bf16.msra.mxu0 %v448
    %576 = vmatpush.bf16.msra.mxu0 %v447
    %577 = vmatmul.bf16.gmra.mxu0 %v114
    %v578 = vpop.f32.mrf.mxu0
    %v579 = vadd.f32 %v566, %v578
    %v580 = vpop.f32.mrf.mxu0
    %581 = vdwg.mxu0
    %582 = vmatpush.bf16.msra.mxu0 %v462
    %583 = vmatpush.bf16.msra.mxu0 %v461
    %584 = vmatpush.bf16.msra.mxu0 %v460
    %585 = vmatpush.bf16.msra.mxu0 %v459
    %586 = vmatpush.bf16.msra.mxu0 %v458
    %587 = vmatpush.bf16.msra.mxu0 %v457
    %588 = vmatpush.bf16.msra.mxu0 %v456
    %589 = vmatpush.bf16.msra.mxu0 %v455
    %590 = vmatmul.bf16.gmra.mxu0 %v115
    %v591 = vpop.f32.mrf.mxu0
    %v592 = vadd.f32 %v579, %v591
    %v593 = vpop.f32.mrf.mxu0
    %594 = vdwg.mxu0
    %595 = vmatpush.bf16.msra.mxu0 0
    %596 = vmatpush.bf16.msra.mxu0 0
    %597 = vmatpush.bf16.msra.mxu0 0
    %598 = vmatpush.bf16.msra.mxu0 0
    %599 = vmatpush.bf16.msra.mxu0 0
    %600 = vmatpush.bf16.msra.mxu0 0
    %601 = vmatpush.bf16.msra.mxu0 0
    %602 = vmatpush.bf16.msra.mxu0 %v463
    %603 = vmatmul.bf16.gmra.mxu0 %v515
    %v604 = vpop.f32.mrf.mxu0
    %v605 = vadd.f32 %v592, %v604
    %v606 = vpop.f32.mrf.mxu0
    %607 = vdwg.mxu0
    %v608 = vmax.f32 %v605, 0.0
    %v609 = vpack.c.bf16 %v608, %v608
    %v610 = vld [vmem:[#allocation7] sm:$0xf]
    %v611 = vld [vmem:[#allocation7 + $0x4] sm:$0xf]
    %v612 = vld [vmem:[#allocation7 + $0x8] sm:$0xf]
    %v613 = vld [vmem:[#allocation7 + $0xc] sm:$0xf]
    %v614 = vld [vmem:[#allocation7 + $0x10] sm:$0xf]
    %v615 = vld [vmem:[#allocation7 + $0x14] sm:$0xf]
    %v616 = vld [vmem:[#allocation7 + $0x18] sm:$0xf]
    %v617 = vld [vmem:[#allocation7 + $0x1c] sm:$0xf]
    %v618 = vld [vmem:[#allocation7 + $0x20] sm:$0xf]
    %v619 = vld [vmem:[#allocation7 + $0x24] sm:$0xf]
    %v620 = vld [vmem:[#allocation7 + $0x28] sm:$0xf]
    %v621 = vld [vmem:[#allocation7 + $0x2c] sm:$0xf]
    %v622 = vld [vmem:[#allocation7 + $0x30] sm:$0xf]
    %v623 = vld [vmem:[#allocation7 + $0x34] sm:$0xf]
    %v624 = vld [vmem:[#allocation7 + $0x38] sm:$0xf]
    %v625 = vld [vmem:[#allocation7 + $0x3c] sm:$0xf]
    %v626 = vld [vmem:[%s4] sm:$0x1]
    %v628 = vperm.slane %v626, 0
    %v646 = vunpack.c.l.b16 %v610
    %v647 = vunpack.c.l.b16 %v611
    %v648 = vunpack.c.l.b16 %v612
    %v649 = vunpack.c.l.b16 %v613
    %v650 = vunpack.c.l.b16 %v614
    %v651 = vunpack.c.l.b16 %v615
    %v652 = vunpack.c.l.b16 %v616
    %v653 = vunpack.c.l.b16 %v617
    %v654 = vunpack.c.l.b16 %v618
    %v655 = vunpack.c.l.b16 %v619
    %v656 = vunpack.c.l.b16 %v620
    %v657 = vunpack.c.l.b16 %v621
    %v658 = vunpack.c.l.b16 %v622
    %v659 = vunpack.c.l.b16 %v623
    %v660 = vunpack.c.l.b16 %v624
    %v661 = vunpack.c.l.b16 %v625
    %v662 = vpack.c.b16 %v647, %v646
    %v663 = vpack.c.b16 %v649, %v648
    %v664 = vpack.c.b16 %v651, %v650
    %v665 = vpack.c.b16 %v653, %v652
    %v666 = vpack.c.b16 %v655, %v654
    %v667 = vpack.c.b16 %v657, %v656
    %v668 = vpack.c.b16 %v659, %v658
    %v669 = vpack.c.b16 %v661, %v660
    %678 = vmatpush.bf16.msra.mxu0 %v669
    %679 = vmatpush.bf16.msra.mxu0 %v668
    %680 = vmatpush.bf16.msra.mxu0 %v667
    %681 = vmatpush.bf16.msra.mxu0 %v666
    %682 = vmatpush.bf16.msra.mxu0 %v665
    %683 = vmatpush.bf16.msra.mxu0 %v664
    %684 = vmatpush.bf16.msra.mxu0 %v663
    %685 = vmatpush.bf16.msra.mxu0 %v662
    %686 = vmatmul.bf16.gmra.mxu0 %v609
    %v687 = vpop.f32.mrf.mxu0
    %v688 = vadd.f32 %v628, %v687
    %v689 = vpop.f32.mrf.mxu0
    %690 = vdwg.mxu0
    %v691 = vmax.f32 %v688, 0.0
    %v692 = vpack.c.bf16 %v691, %v691
    %v693 = vld [vmem:[#allocation8] sm:$0xf]
    %v694 = vld [vmem:[#allocation8 + $0x4] sm:$0xf]
    %v695 = vld [vmem:[#allocation8 + $0x8] sm:$0xf]
    %v696 = vld [vmem:[#allocation8 + $0xc] sm:$0xf]
    %v697 = vld [vmem:[#allocation8 + $0x10] sm:$0xf]
    %v698 = vld [vmem:[#allocation8 + $0x14] sm:$0xf]
    %v699 = vld [vmem:[#allocation8 + $0x18] sm:$0xf]
    %v700 = vld [vmem:[#allocation8 + $0x1c] sm:$0xf]
    %v701 = vld [vmem:[#allocation8 + $0x20] sm:$0xf]
    %v702 = vld [vmem:[#allocation8 + $0x24] sm:$0xf]
    %v703 = vld [vmem:[#allocation8 + $0x28] sm:$0xf]
    %v704 = vld [vmem:[#allocation8 + $0x2c] sm:$0xf]
    %v705 = vld [vmem:[#allocation8 + $0x30] sm:$0xf]
    %v706 = vld [vmem:[#allocation8 + $0x34] sm:$0xf]
    %v707 = vld [vmem:[#allocation8 + $0x38] sm:$0xf]
    %v708 = vld [vmem:[#allocation8 + $0x3c] sm:$0xf]
    %v709 = vld [vmem:[%s6] sm:$0x1]
    %v711 = vperm.slane %v709, 0
    %v729 = vunpack.c.l.b16 %v693
    %v730 = vunpack.c.l.b16 %v694
    %v731 = vunpack.c.l.b16 %v695
    %v732 = vunpack.c.l.b16 %v696
    %v733 = vunpack.c.l.b16 %v697
    %v734 = vunpack.c.l.b16 %v698
    %v735 = vunpack.c.l.b16 %v699
    %v736 = vunpack.c.l.b16 %v700
    %v737 = vunpack.c.l.b16 %v701
    %v738 = vunpack.c.l.b16 %v702
    %v739 = vunpack.c.l.b16 %v703
    %v740 = vunpack.c.l.b16 %v704
    %v741 = vunpack.c.l.b16 %v705
    %v742 = vunpack.c.l.b16 %v706
    %v743 = vunpack.c.l.b16 %v707
    %v744 = vunpack.c.l.b16 %v708
    %v745 = vpack.c.b16 %v730, %v729
    %v746 = vpack.c.b16 %v732, %v731
    %v747 = vpack.c.b16 %v734, %v733
    %v748 = vpack.c.b16 %v736, %v735
    %v749 = vpack.c.b16 %v738, %v737
    %v750 = vpack.c.b16 %v740, %v739
    %v751 = vpack.c.b16 %v742, %v741
    %v752 = vpack.c.b16 %v744, %v743
    %761 = vmatpush.bf16.msra.mxu0 %v752
    %762 = vmatpush.bf16.msra.mxu0 %v751
    %763 = vmatpush.bf16.msra.mxu0 %v750
    %764 = vmatpush.bf16.msra.mxu0 %v749
    %765 = vmatpush.bf16.msra.mxu0 %v748
    %766 = vmatpush.bf16.msra.mxu0 %v747
    %767 = vmatpush.bf16.msra.mxu0 %v746
    %768 = vmatpush.bf16.msra.mxu0 %v745
    %769 = vmatmul.bf16.gmra.mxu0 %v692
    %v770 = vpop.f32.mrf.mxu0
    %v771 = vadd.f32 %v711, %v770
    %v772 = vpop.f32.mrf.mxu0
    %773 = vdwg.mxu0
    %v774 = vpack.c.bf16 %v771, %v771
    %775 = vst [vmem:[#allocation10] sm:$0x1] %v774
    // Predicated region
    $region46: #{tpu_custom_call.1} parent=1 // pred_check
      _
    $region47: #{tpu_custom_call.1} parent=1 // pred_check_branch
      %777 = sbr.rel (0) target = $region49
    $region48: #{tpu_custom_call.1} parent=1 // pred_region
      %779 = vsyncadd [#allocation4], 0
      %s781 = sshll.u32 [#allocation10], 4
      %s782 = int_to_ptr.vmem [resolvable:$true] %s781
      %s783 = sshll.u32 %s7, 4
      %s784 = int_to_ptr.hbm [resolvable:$true] %s783
      %786 = dma.vmem_to_hbm [thread:$0]  %s782, 16, %s784, [#allocation4]
    $region49: #{tpu_custom_call.1} parent=1 // pred_fallthru
      _
    // Predicated region
    $region50: #{tpu_custom_call.1} parent=1 // pred_check
      _
    $region51: #{tpu_custom_call.1} parent=1 // pred_check_branch
      %788 = sbr.rel (0) target = $region53
    $region52: #{tpu_custom_call.1} parent=1 // pred_region
      %790 = dma.done [#allocation4], 16
    $region53: #{tpu_custom_call.1} parent=1 // pred_fallthru
      _
    %791 = vsyncpa [#allocation3], 1
    %792 = vsyncpa [#allocation6], 1
    %793 = vsyncpa [#allocation9], 1
    %794 = vsyncpa [#allocation4], 1

</llo_original>
